<compile_context>
chip_gen: v7x
topology: tpu7x:2x2x1
jax: 0.10.0
libtpu: 0.0.40
codegen_flags: <defaults>
</compile_context>

<pallas_src>
import functools

import numpy as np
import jax
import jax.numpy as jnp
from jax import lax
from jax.experimental import pallas as pl
from jax.experimental.pallas import tpu as pltpu


def _round_up(a, m):
    return (a + m - 1) // m * m


def _conv_down_kernel(x_ref, w1_ref, b1_ref, w2_ref, b2_ref, sel_ref,
                      feat_ref, pool_ref, col1_ref, y1_ref, col2_ref,
                      *, W, Cin_p, Cout_p, N1, N2, Nm):
    """Fused conv1+ReLU -> conv2+ReLU -> MaxPool2d(2,2) for one batch element.

    x_ref:    (1, Cin_p, Lin)      zero-padded, spatially-flattened input (row stride W)
    w1_ref:   (Cout_p, 9*Cin_p)    tap-major conv1 weights      b1_ref: (Cout_p, 1)
    w2_ref:   (Cout_p, 9*Cout_p)   tap-major conv2 weights      b2_ref: (Cout_p, 1)
    sel_ref:  (Nm, Ppad)           single one-hot pool-decimation matrix
    feat_ref: (1, Cout_p, N2)      conv2 output, flat with row stride W (lane-padded)
    pool_ref: (1, Cout_p, Ppad)    pooled output, flat (lane-padded)
    col1_ref: (9*Cin_p, N1)        VMEM scratch: im2col slab for conv1
    y1_ref:   (Cout_p, N1)         VMEM scratch: conv1 activation
    col2_ref: (9*Cout_p, N2)       VMEM scratch: im2col slab for conv2
    """
    f32 = jnp.float32

    # ---- conv1 (3x3 VALID): build im2col slab, ONE K=9*Cin_p matmul, bias+ReLU ----
    for kh in range(3):
        for kw in range(3):
            t = kh * 3 + kw
            col1_ref[pl.ds(t * Cin_p, Cin_p), :] = x_ref[0, :, pl.ds(kh * W + kw, N1)]
    y1 = jnp.dot(w1_ref[...], col1_ref[...], preferred_element_type=f32)   # (Cout_p, N1)
    y1_ref[...] = jnp.maximum(y1 + b1_ref[...], 0.0)

    # ---- conv2 (3x3 VALID): build im2col slab, ONE K=9*Cout_p matmul, bias+ReLU ----
    for kh in range(3):
        for kw in range(3):
            t = kh * 3 + kw
            col2_ref[pl.ds(t * Cout_p, Cout_p), :] = y1_ref[:, pl.ds(kh * W + kw, N2)]
    y2 = jnp.maximum(
        jnp.dot(w2_ref[...], col2_ref[...], preferred_element_type=f32) + b2_ref[...],
        0.0)                                                               # (Cout_p, N2)
    feat_ref[0, :, :] = y2.astype(feat_ref.dtype)

    # ---- MaxPool2d(2,2): 3 VPU maxes over shifted slices + one decimation matmul ----
    m = jnp.maximum(
        jnp.maximum(y2[:, 0:Nm], y2[:, 1:1 + Nm]),
        jnp.maximum(y2[:, W:W + Nm], y2[:, W + 1:W + 1 + Nm]))            # (Cout_p, Nm)
    pool_ref[0, :, :] = jnp.dot(m, sel_ref[...],
                                preferred_element_type=f32).astype(pool_ref.dtype)


def conv_down_forward(x_nchw, params):
    """Pallas equivalent of Conv_down.forward: returns (pool_x, x), both NCHW."""
    w1, b1, w2, b2 = params
    N, Cin, H, Wd = x_nchw.shape
    Cout = w1.shape[0]
    Ho2, Wo2 = H - 4, Wd - 4                    # conv2 spatial output
    Hp, Wp = Ho2 // 2, Wo2 // 2                 # pooled output (floor mode, like PyTorch)
    P = Hp * Wp

    Cin_p = _round_up(Cin, 8)                   # sublane-aligned channel blocks
    Cout_p = _round_up(Cout, 8)
    max_off = 2 * Wd + 2                        # largest 3x3 tap offset in flat coords
    N2u = Ho2 * Wd                              # valid conv2 lanes (row stride Wd)
    Nm = N2u                                    # lanes fed into the pool decimation
    N2 = _round_up(N2u + Wd + 2, 128)           # feat lane width (room for +W+1 shift)
    N1 = _round_up(N2 + max_off, 128)           # conv1 scratch lane width
    Lin = _round_up(N1 + max_off, 128)          # padded flat input lane width
    Ppad = _round_up(P, 128)                    # lane-dense pool output width

    # Glue (tiny XLA ops): channel/lane zero-padding, tap-major weight layout.
    x_flat = jnp.pad(x_nchw.reshape(N, Cin, H * Wd),
                     ((0, 0), (0, Cin_p - Cin), (0, Lin - H * Wd)))
    w1_p = jnp.pad(w1, ((0, Cout_p - Cout), (0, Cin_p - Cin), (0, 0), (0, 0)))
    w2_p = jnp.pad(w2, ((0, Cout_p - Cout), (0, Cout_p - Cout), (0, 0), (0, 0)))
    w1_r = jnp.transpose(w1_p, (0, 2, 3, 1)).reshape(Cout_p, 9 * Cin_p)
    w2_r = jnp.transpose(w2_p, (0, 2, 3, 1)).reshape(Cout_p, 9 * Cout_p)
    b1_r = jnp.pad(b1, (0, Cout_p - Cout)).reshape(Cout_p, 1)
    b2_r = jnp.pad(b2, (0, Cout_p - Cout)).reshape(Cout_p, 1)

    # Single one-hot decimation matrix (trace-time numpy constant).
    # After the shifted-max, window (i,j)'s max sits at flat position (2i)*Wd + 2j.
    sel_np = np.zeros((Nm, Ppad), np.float32)
    for i in range(Hp):
        for j in range(Wp):
            sel_np[(2 * i) * Wd + 2 * j, i * Wp + j] = 1.0
    sel = jnp.asarray(sel_np)

    kernel = functools.partial(_conv_down_kernel, W=Wd, Cin_p=Cin_p, Cout_p=Cout_p,
                               N1=N1, N2=N2, Nm=Nm)

    feat_flat, pool_flat = pl.pallas_call(
        kernel,
        out_shape=(
            jax.ShapeDtypeStruct((N, Cout_p, N2), x_nchw.dtype),
            jax.ShapeDtypeStruct((N, Cout_p, Ppad), x_nchw.dtype),
        ),
        grid_spec=pltpu.PrefetchScalarGridSpec(
            num_scalar_prefetch=0,
            grid=(N,),
            in_specs=[
                pl.BlockSpec((1, Cin_p, Lin), lambda n: (n, 0, 0)),
                pl.BlockSpec((Cout_p, 9 * Cin_p), lambda n: (0, 0)),
                pl.BlockSpec((Cout_p, 1), lambda n: (0, 0)),
                pl.BlockSpec((Cout_p, 9 * Cout_p), lambda n: (0, 0)),
                pl.BlockSpec((Cout_p, 1), lambda n: (0, 0)),
                pl.BlockSpec((Nm, Ppad), lambda n: (0, 0)),
            ],
            out_specs=(
                pl.BlockSpec((1, Cout_p, N2), lambda n: (n, 0, 0)),
                pl.BlockSpec((1, Cout_p, Ppad), lambda n: (n, 0, 0)),
            ),
            scratch_shapes=[
                pltpu.VMEM((9 * Cin_p, N1), jnp.float32),
                pltpu.VMEM((Cout_p, N1), jnp.float32),
                pltpu.VMEM((9 * Cout_p, N2), jnp.float32),
            ]),
        compiler_params=pltpu.CompilerParams(dimension_semantics=("parallel",)),
    )(x_flat, w1_r, b1_r, w2_r, b2_r, sel)

    # Tiny XLA post-slices: drop channel/lane padding and the 2 wrap-around columns.
    feat = feat_flat[:, :Cout, :N2u].reshape(N, Cout, Ho2, Wd)[:, :, :, :Wo2]
    pool = pool_flat[:, :Cout, :P].reshape(N, Cout, Hp, Wp)
    return pool, feat


def init_params(key, in_ch, out_ch):
    """Deterministic init matching nn.Conv2d parameter shapes (OIHW weights, per-Cout bias)."""
    k1, k2, k3, k4 = jax.random.split(key, 4)
    s1 = 1.0 / (in_ch * 9) ** 0.5
    s2 = 1.0 / (out_ch * 9) ** 0.5
    w1 = jax.random.uniform(k1, (out_ch, in_ch, 3, 3), jnp.float32, -s1, s1)
    b1 = jax.random.uniform(k2, (out_ch,), jnp.float32, -s1, s1)
    w2 = jax.random.uniform(k3, (out_ch, out_ch, 3, 3), jnp.float32, -s2, s2)
    b2 = jax.random.uniform(k4, (out_ch,), jnp.float32, -s2, s2)
    return w1, b1, w2, b2


def _reference_forward(x, params):
    """Pure-JAX reference of the PyTorch module (default matmul precision)."""
    w1, b1, w2, b2 = params

    def conv(x, w, b):
        y = lax.conv_general_dilated(
            x, w, window_strides=(1, 1), padding="VALID",
            dimension_numbers=("NCHW", "OIHW", "NCHW"))
        return jax.nn.relu(y + b[None, :, None, None])

    y = conv(conv(x, w1, b1), w2, b2)
    p = lax.reduce_window(y, -jnp.inf, lax.max,
                          (1, 1, 2, 2), (1, 1, 2, 2), "VALID")
    return p, y


if __name__ == "__main__":
    key = jax.random.PRNGKey(0)
    kx, kp = jax.random.split(key)
    in_ch, out_ch = 4, 8
    x = jax.random.normal(kx, (2, in_ch, 16, 16), jnp.float32)   # NCHW, like PyTorch
    params = init_params(kp, in_ch, out_ch)

    pool_x, feat = jax.jit(conv_down_forward)(x, params)
    jax.block_until_ready((pool_x, feat))

    # sanity check against pure-JAX reference
    ref_pool, ref_feat = _reference_forward(x, params)
    assert pool_x.shape == (2, out_ch, 6, 6) and feat.shape == (2, out_ch, 12, 12)
    assert jnp.max(jnp.abs(feat - ref_feat)) < 1e-2
    assert jnp.max(jnp.abs(pool_x - ref_pool)) < 1e-2

    print("KERNEL_OK")
</pallas_src>

<mosaic_0001>
module attributes {stable_mosaic.version = 11 : i64} {
  func.func @_conv_down_kernel(%arg0: i32, %arg1: memref<1x8x512xf32, #tpu.memory_space<vmem>>, %arg2: memref<8x72xf32, #tpu.memory_space<vmem>>, %arg3: memref<8x1xf32, #tpu.memory_space<vmem>>, %arg4: memref<8x72xf32, #tpu.memory_space<vmem>>, %arg5: memref<8x1xf32, #tpu.memory_space<vmem>>, %arg6: memref<192x128xf32, #tpu.memory_space<vmem>>, %arg7: memref<1x8x256xf32, #tpu.memory_space<vmem>>, %arg8: memref<1x8x128xf32, #tpu.memory_space<vmem>>, %arg9: memref<72x384xf32, #tpu.memory_space<vmem>>, %arg10: memref<8x384xf32, #tpu.memory_space<vmem>>, %arg11: memref<72x256xf32, #tpu.memory_space<vmem>>) attributes {dimension_semantics = [#tpu.dimension_semantics<parallel>], iteration_bounds = array<i64: 2>, scalar_prefetch = 0 : i64, scratch_operands = 3 : i64, tpu.core_type = #tpu.core_type<tc>, window_params = [{transform_indices = @transform_0, window_bounds = array<i64: 1, 8, 512>}, {pipeline_mode = #tpu.pipeline_mode<synchronous>, transform_indices = @transform_1, window_bounds = array<i64: 8, 72>}, {pipeline_mode = #tpu.pipeline_mode<synchronous>, transform_indices = @transform_2, window_bounds = array<i64: 8, 1>}, {pipeline_mode = #tpu.pipeline_mode<synchronous>, transform_indices = @transform_3, window_bounds = array<i64: 8, 72>}, {pipeline_mode = #tpu.pipeline_mode<synchronous>, transform_indices = @transform_4, window_bounds = array<i64: 8, 1>}, {pipeline_mode = #tpu.pipeline_mode<synchronous>, transform_indices = @transform_5, window_bounds = array<i64: 192, 128>}, {transform_indices = @transform_6, window_bounds = array<i64: 1, 8, 256>}, {transform_indices = @transform_7, window_bounds = array<i64: 1, 8, 128>}]} {
    %c0 = arith.constant 0 : index
    %c0_0 = arith.constant 0 : index
    %c0_1 = arith.constant 0 : index
    %0 = vector.load %arg1[%c0, %c0_0, %c0_1] : memref<1x8x512xf32, #tpu.memory_space<vmem>>, vector<1x8x384xf32>
    %1 = vector.shape_cast %0 : vector<1x8x384xf32> to vector<8x384xf32>
    %c0_2 = arith.constant 0 : index
    %c0_3 = arith.constant 0 : index
    %2 = vector.load %arg9[%c0_2, %c0_3] : memref<72x384xf32, #tpu.memory_space<vmem>>, vector<8x384xf32>
    tpu.vector_store %arg9[%c0_2, %c0_3], %1 {strides = array<i32>} : memref<72x384xf32, #tpu.memory_space<vmem>>, vector<8x384xf32>,
    %c0_4 = arith.constant 0 : index
    %c0_5 = arith.constant 0 : index
    %c1 = arith.constant 1 : index
    %3 = vector.load %arg1[%c0_4, %c0_5, %c1] : memref<1x8x512xf32, #tpu.memory_space<vmem>>, vector<1x8x384xf32>
    %4 = vector.shape_cast %3 : vector<1x8x384xf32> to vector<8x384xf32>
    %c8 = arith.constant 8 : index
    %c0_6 = arith.constant 0 : index
    %5 = vector.load %arg9[%c8, %c0_6] : memref<72x384xf32, #tpu.memory_space<vmem>>, vector<8x384xf32>
    tpu.vector_store %arg9[%c8, %c0_6], %4 {strides = array<i32>} : memref<72x384xf32, #tpu.memory_space<vmem>>, vector<8x384xf32>,
    %c0_7 = arith.constant 0 : index
    %c0_8 = arith.constant 0 : index
    %c2 = arith.constant 2 : index
    %6 = vector.load %arg1[%c0_7, %c0_8, %c2] : memref<1x8x512xf32, #tpu.memory_space<vmem>>, vector<1x8x384xf32>
    %7 = vector.shape_cast %6 : vector<1x8x384xf32> to vector<8x384xf32>
    %c16 = arith.constant 16 : index
    %c0_9 = arith.constant 0 : index
    %8 = vector.load %arg9[%c16, %c0_9] : memref<72x384xf32, #tpu.memory_space<vmem>>, vector<8x384xf32>
    tpu.vector_store %arg9[%c16, %c0_9], %7 {strides = array<i32>} : memref<72x384xf32, #tpu.memory_space<vmem>>, vector<8x384xf32>,
    %c0_10 = arith.constant 0 : index
    %c0_11 = arith.constant 0 : index
    %c16_12 = arith.constant 16 : index
    %9 = vector.load %arg1[%c0_10, %c0_11, %c16_12] : memref<1x8x512xf32, #tpu.memory_space<vmem>>, vector<1x8x384xf32>
    %10 = vector.shape_cast %9 : vector<1x8x384xf32> to vector<8x384xf32>
    %c24 = arith.constant 24 : index
    %c0_13 = arith.constant 0 : index
    %11 = vector.load %arg9[%c24, %c0_13] : memref<72x384xf32, #tpu.memory_space<vmem>>, vector<8x384xf32>
    tpu.vector_store %arg9[%c24, %c0_13], %10 {strides = array<i32>} : memref<72x384xf32, #tpu.memory_space<vmem>>, vector<8x384xf32>,
    %c0_14 = arith.constant 0 : index
    %c0_15 = arith.constant 0 : index
    %c17 = arith.constant 17 : index
    %12 = vector.load %arg1[%c0_14, %c0_15, %c17] : memref<1x8x512xf32, #tpu.memory_space<vmem>>, vector<1x8x384xf32>
    %13 = vector.shape_cast %12 : vector<1x8x384xf32> to vector<8x384xf32>
    %c32 = arith.constant 32 : index
    %c0_16 = arith.constant 0 : index
    %14 = vector.load %arg9[%c32, %c0_16] : memref<72x384xf32, #tpu.memory_space<vmem>>, vector<8x384xf32>
    tpu.vector_store %arg9[%c32, %c0_16], %13 {strides = array<i32>} : memref<72x384xf32, #tpu.memory_space<vmem>>, vector<8x384xf32>,
    %c0_17 = arith.constant 0 : index
    %c0_18 = arith.constant 0 : index
    %c18 = arith.constant 18 : index
    %15 = vector.load %arg1[%c0_17, %c0_18, %c18] : memref<1x8x512xf32, #tpu.memory_space<vmem>>, vector<1x8x384xf32>
    %16 = vector.shape_cast %15 : vector<1x8x384xf32> to vector<8x384xf32>
    %c40 = arith.constant 40 : index
    %c0_19 = arith.constant 0 : index
    %17 = vector.load %arg9[%c40, %c0_19] : memref<72x384xf32, #tpu.memory_space<vmem>>, vector<8x384xf32>
    tpu.vector_store %arg9[%c40, %c0_19], %16 {strides = array<i32>} : memref<72x384xf32, #tpu.memory_space<vmem>>, vector<8x384xf32>,
    %c0_20 = arith.constant 0 : index
    %c0_21 = arith.constant 0 : index
    %c32_22 = arith.constant 32 : index
    %18 = vector.load %arg1[%c0_20, %c0_21, %c32_22] : memref<1x8x512xf32, #tpu.memory_space<vmem>>, vector<1x8x384xf32>
    %19 = vector.shape_cast %18 : vector<1x8x384xf32> to vector<8x384xf32>
    %c48 = arith.constant 48 : index
    %c0_23 = arith.constant 0 : index
    %20 = vector.load %arg9[%c48, %c0_23] : memref<72x384xf32, #tpu.memory_space<vmem>>, vector<8x384xf32>
    tpu.vector_store %arg9[%c48, %c0_23], %19 {strides = array<i32>} : memref<72x384xf32, #tpu.memory_space<vmem>>, vector<8x384xf32>,
    %c0_24 = arith.constant 0 : index
    %c0_25 = arith.constant 0 : index
    %c33 = arith.constant 33 : index
    %21 = vector.load %arg1[%c0_24, %c0_25, %c33] : memref<1x8x512xf32, #tpu.memory_space<vmem>>, vector<1x8x384xf32>
    %22 = vector.shape_cast %21 : vector<1x8x384xf32> to vector<8x384xf32>
    %c56 = arith.constant 56 : index
    %c0_26 = arith.constant 0 : index
    %23 = vector.load %arg9[%c56, %c0_26] : memref<72x384xf32, #tpu.memory_space<vmem>>, vector<8x384xf32>
    tpu.vector_store %arg9[%c56, %c0_26], %22 {strides = array<i32>} : memref<72x384xf32, #tpu.memory_space<vmem>>, vector<8x384xf32>,
    %c0_27 = arith.constant 0 : index
    %c0_28 = arith.constant 0 : index
    %c34 = arith.constant 34 : index
    %24 = vector.load %arg1[%c0_27, %c0_28, %c34] : memref<1x8x512xf32, #tpu.memory_space<vmem>>, vector<1x8x384xf32>
    %25 = vector.shape_cast %24 : vector<1x8x384xf32> to vector<8x384xf32>
    %c64 = arith.constant 64 : index
    %c0_29 = arith.constant 0 : index
    %26 = vector.load %arg9[%c64, %c0_29] : memref<72x384xf32, #tpu.memory_space<vmem>>, vector<8x384xf32>
    tpu.vector_store %arg9[%c64, %c0_29], %25 {strides = array<i32>} : memref<72x384xf32, #tpu.memory_space<vmem>>, vector<8x384xf32>,
    %c0_30 = arith.constant 0 : index
    %c0_31 = arith.constant 0 : index
    %27 = vector.load %arg2[%c0_30, %c0_31] : memref<8x72xf32, #tpu.memory_space<vmem>>, vector<8x72xf32>
    %c0_32 = arith.constant 0 : index
    %c0_33 = arith.constant 0 : index
    %28 = vector.load %arg9[%c0_32, %c0_33] : memref<72x384xf32, #tpu.memory_space<vmem>>, vector<72x384xf32>
    %cst = arith.constant dense<0.000000e+00> : vector<8x384xf32>
    %29 = tpu.matmul %27, %28, %cst {dimension_numbers = #tpu.dot_dimension_numbers<[1], [0], [0], [1], [0, 0, 1, 1], [], []>} : vector<8x72xf32>, vector<72x384xf32>, vector<8x384xf32> -> vector<8x384xf32>
    %c0_34 = arith.constant 0 : index
    %c0_35 = arith.constant 0 : index
    %30 = vector.load %arg3[%c0_34, %c0_35] : memref<8x1xf32, #tpu.memory_space<vmem>>, vector<8x1xf32>
    %31 = vector.broadcast %30 : vector<8x1xf32> to vector<8x384xf32>
    %32 = arith.addf %29, %31 : vector<8x384xf32>
    %cst_36 = arith.constant 0.000000e+00 : f32
    %33 = vector.broadcast %cst_36 : f32 to vector<8x384xf32>
    %34 = arith.maximumf %32, %33 : vector<8x384xf32>
    %c0_37 = arith.constant 0 : index
    %c0_38 = arith.constant 0 : index
    %35 = vector.load %arg10[%c0_37, %c0_38] : memref<8x384xf32, #tpu.memory_space<vmem>>, vector<8x384xf32>
    tpu.vector_store %arg10[%c0_37, %c0_38], %34 {strides = array<i32>} : memref<8x384xf32, #tpu.memory_space<vmem>>, vector<8x384xf32>,
    %c0_39 = arith.constant 0 : index
    %c0_40 = arith.constant 0 : index
    %36 = vector.load %arg10[%c0_39, %c0_40] : memref<8x384xf32, #tpu.memory_space<vmem>>, vector<8x256xf32>
    %c0_41 = arith.constant 0 : index
    %c0_42 = arith.constant 0 : index
    %37 = vector.load %arg11[%c0_41, %c0_42] : memref<72x256xf32, #tpu.memory_space<vmem>>, vector<8x256xf32>
    tpu.vector_store %arg11[%c0_41, %c0_42], %36 {strides = array<i32>} : memref<72x256xf32, #tpu.memory_space<vmem>>, vector<8x256xf32>,
    %c0_43 = arith.constant 0 : index
    %c1_44 = arith.constant 1 : index
    %38 = vector.load %arg10[%c0_43, %c1_44] : memref<8x384xf32, #tpu.memory_space<vmem>>, vector<8x256xf32>
    %c8_45 = arith.constant 8 : index
    %c0_46 = arith.constant 0 : index
    %39 = vector.load %arg11[%c8_45, %c0_46] : memref<72x256xf32, #tpu.memory_space<vmem>>, vector<8x256xf32>
    tpu.vector_store %arg11[%c8_45, %c0_46], %38 {strides = array<i32>} : memref<72x256xf32, #tpu.memory_space<vmem>>, vector<8x256xf32>,
    %c0_47 = arith.constant 0 : index
    %c2_48 = arith.constant 2 : index
    %40 = vector.load %arg10[%c0_47, %c2_48] : memref<8x384xf32, #tpu.memory_space<vmem>>, vector<8x256xf32>
    %c16_49 = arith.constant 16 : index
    %c0_50 = arith.constant 0 : index
    %41 = vector.load %arg11[%c16_49, %c0_50] : memref<72x256xf32, #tpu.memory_space<vmem>>, vector<8x256xf32>
    tpu.vector_store %arg11[%c16_49, %c0_50], %40 {strides = array<i32>} : memref<72x256xf32, #tpu.memory_space<vmem>>, vector<8x256xf32>,
    %c0_51 = arith.constant 0 : index
    %c16_52 = arith.constant 16 : index
    %42 = vector.load %arg10[%c0_51, %c16_52] : memref<8x384xf32, #tpu.memory_space<vmem>>, vector<8x256xf32>
    %c24_53 = arith.constant 24 : index
    %c0_54 = arith.constant 0 : index
    %43 = vector.load %arg11[%c24_53, %c0_54] : memref<72x256xf32, #tpu.memory_space<vmem>>, vector<8x256xf32>
    tpu.vector_store %arg11[%c24_53, %c0_54], %42 {strides = array<i32>} : memref<72x256xf32, #tpu.memory_space<vmem>>, vector<8x256xf32>,
    %c0_55 = arith.constant 0 : index
    %c17_56 = arith.constant 17 : index
    %44 = vector.load %arg10[%c0_55, %c17_56] : memref<8x384xf32, #tpu.memory_space<vmem>>, vector<8x256xf32>
    %c32_57 = arith.constant 32 : index
    %c0_58 = arith.constant 0 : index
    %45 = vector.load %arg11[%c32_57, %c0_58] : memref<72x256xf32, #tpu.memory_space<vmem>>, vector<8x256xf32>
    tpu.vector_store %arg11[%c32_57, %c0_58], %44 {strides = array<i32>} : memref<72x256xf32, #tpu.memory_space<vmem>>, vector<8x256xf32>,
    %c0_59 = arith.constant 0 : index
    %c18_60 = arith.constant 18 : index
    %46 = vector.load %arg10[%c0_59, %c18_60] : memref<8x384xf32, #tpu.memory_space<vmem>>, vector<8x256xf32>
    %c40_61 = arith.constant 40 : index
    %c0_62 = arith.constant 0 : index
    %47 = vector.load %arg11[%c40_61, %c0_62] : memref<72x256xf32, #tpu.memory_space<vmem>>, vector<8x256xf32>
    tpu.vector_store %arg11[%c40_61, %c0_62], %46 {strides = array<i32>} : memref<72x256xf32, #tpu.memory_space<vmem>>, vector<8x256xf32>,
    %c0_63 = arith.constant 0 : index
    %c32_64 = arith.constant 32 : index
    %48 = vector.load %arg10[%c0_63, %c32_64] : memref<8x384xf32, #tpu.memory_space<vmem>>, vector<8x256xf32>
    %c48_65 = arith.constant 48 : index
    %c0_66 = arith.constant 0 : index
    %49 = vector.load %arg11[%c48_65, %c0_66] : memref<72x256xf32, #tpu.memory_space<vmem>>, vector<8x256xf32>
    tpu.vector_store %arg11[%c48_65, %c0_66], %48 {strides = array<i32>} : memref<72x256xf32, #tpu.memory_space<vmem>>, vector<8x256xf32>,
    %c0_67 = arith.constant 0 : index
    %c33_68 = arith.constant 33 : index
    %50 = vector.load %arg10[%c0_67, %c33_68] : memref<8x384xf32, #tpu.memory_space<vmem>>, vector<8x256xf32>
    %c56_69 = arith.constant 56 : index
    %c0_70 = arith.constant 0 : index
    %51 = vector.load %arg11[%c56_69, %c0_70] : memref<72x256xf32, #tpu.memory_space<vmem>>, vector<8x256xf32>
    tpu.vector_store %arg11[%c56_69, %c0_70], %50 {strides = array<i32>} : memref<72x256xf32, #tpu.memory_space<vmem>>, vector<8x256xf32>,
    %c0_71 = arith.constant 0 : index
    %c34_72 = arith.constant 34 : index
    %52 = vector.load %arg10[%c0_71, %c34_72] : memref<8x384xf32, #tpu.memory_space<vmem>>, vector<8x256xf32>
    %c64_73 = arith.constant 64 : index
    %c0_74 = arith.constant 0 : index
    %53 = vector.load %arg11[%c64_73, %c0_74] : memref<72x256xf32, #tpu.memory_space<vmem>>, vector<8x256xf32>
    tpu.vector_store %arg11[%c64_73, %c0_74], %52 {strides = array<i32>} : memref<72x256xf32, #tpu.memory_space<vmem>>, vector<8x256xf32>,
    %c0_75 = arith.constant 0 : index
    %c0_76 = arith.constant 0 : index
    %54 = vector.load %arg4[%c0_75, %c0_76] : memref<8x72xf32, #tpu.memory_space<vmem>>, vector<8x72xf32>
    %c0_77 = arith.constant 0 : index
    %c0_78 = arith.constant 0 : index
    %55 = vector.load %arg11[%c0_77, %c0_78] : memref<72x256xf32, #tpu.memory_space<vmem>>, vector<72x256xf32>
    %cst_79 = arith.constant dense<0.000000e+00> : vector<8x256xf32>
    %56 = tpu.matmul %54, %55, %cst_79 {dimension_numbers = #tpu.dot_dimension_numbers<[1], [0], [0], [1], [0, 0, 1, 1], [], []>} : vector<8x72xf32>, vector<72x256xf32>, vector<8x256xf32> -> vector<8x256xf32>
    %c0_80 = arith.constant 0 : index
    %c0_81 = arith.constant 0 : index
    %57 = vector.load %arg5[%c0_80, %c0_81] : memref<8x1xf32, #tpu.memory_space<vmem>>, vector<8x1xf32>
    %58 = vector.broadcast %57 : vector<8x1xf32> to vector<8x256xf32>
    %59 = arith.addf %56, %58 : vector<8x256xf32>
    %cst_82 = arith.constant 0.000000e+00 : f32
    %60 = vector.broadcast %cst_82 : f32 to vector<8x256xf32>
    %61 = arith.maximumf %59, %60 : vector<8x256xf32>
    %c0_83 = arith.constant 0 : index
    %c0_84 = arith.constant 0 : index
    %c0_85 = arith.constant 0 : index
    %62 = vector.load %arg7[%c0_83, %c0_84, %c0_85] : memref<1x8x256xf32, #tpu.memory_space<vmem>>, vector<1x8x256xf32>
    %63 = vector.shape_cast %62 : vector<1x8x256xf32> to vector<8x256xf32>
    %64 = vector.shape_cast %61 : vector<8x256xf32> to vector<1x8x256xf32>
    tpu.vector_store %arg7[%c0_83, %c0_84, %c0_85], %64 {strides = array<i32>} : memref<1x8x256xf32, #tpu.memory_space<vmem>>, vector<1x8x256xf32>,
    %65 = vector.extract_strided_slice %61 {offsets = [0, 0], sizes = [8, 192], strides = [1, 1]} : vector<8x256xf32> to vector<8x192xf32>
    %66 = vector.extract_strided_slice %61 {offsets = [0, 1], sizes = [8, 192], strides = [1, 1]} : vector<8x256xf32> to vector<8x192xf32>
    %67 = arith.maximumf %65, %66 : vector<8x192xf32>
    %68 = vector.extract_strided_slice %61 {offsets = [0, 16], sizes = [8, 192], strides = [1, 1]} : vector<8x256xf32> to vector<8x192xf32>
    %69 = vector.extract_strided_slice %61 {offsets = [0, 17], sizes = [8, 192], strides = [1, 1]} : vector<8x256xf32> to vector<8x192xf32>
    %70 = arith.maximumf %68, %69 : vector<8x192xf32>
    %71 = arith.maximumf %67, %70 : vector<8x192xf32>
    %c0_86 = arith.constant 0 : index
    %c0_87 = arith.constant 0 : index
    %72 = vector.load %arg6[%c0_86, %c0_87] : memref<192x128xf32, #tpu.memory_space<vmem>>, vector<192x128xf32>
    %cst_88 = arith.constant dense<0.000000e+00> : vector<8x128xf32>
    %73 = tpu.matmul %71, %72, %cst_88 {dimension_numbers = #tpu.dot_dimension_numbers<[1], [0], [0], [1], [0, 0, 1, 1], [], []>} : vector<8x192xf32>, vector<192x128xf32>, vector<8x128xf32> -> vector<8x128xf32>
    %c0_89 = arith.constant 0 : index
    %c0_90 = arith.constant 0 : index
    %c0_91 = arith.constant 0 : index
    %74 = vector.load %arg8[%c0_89, %c0_90, %c0_91] : memref<1x8x128xf32, #tpu.memory_space<vmem>>, vector<1x8x128xf32>
    %75 = vector.shape_cast %74 : vector<1x8x128xf32> to vector<8x128xf32>
    %76 = vector.shape_cast %73 : vector<8x128xf32> to vector<1x8x128xf32>
    tpu.vector_store %arg8[%c0_89, %c0_90, %c0_91], %76 {strides = array<i32>} : memref<1x8x128xf32, #tpu.memory_space<vmem>>, vector<1x8x128xf32>,
    return
  }
  func.func @transform_0(%arg0: i32) -> (i32, i32, i32) {
    %c0_i32 = arith.constant 0 : i32
    %c0_i32_0 = arith.constant 0 : i32
    %c0_i32_1 = arith.constant 0 : i32
    return %arg0, %c0_i32, %c0_i32_0 : i32, i32, i32
  }
  func.func @transform_1(%arg0: i32) -> (i32, i32) {
    %c0_i32 = arith.constant 0 : i32
    %c0_i32_0 = arith.constant 0 : i32
    %c0_i32_1 = arith.constant 0 : i32
    return %c0_i32, %c0_i32_0 : i32, i32
  }
  func.func @transform_2(%arg0: i32) -> (i32, i32) {
    %c0_i32 = arith.constant 0 : i32
    %c0_i32_0 = arith.constant 0 : i32
    %c0_i32_1 = arith.constant 0 : i32
    return %c0_i32, %c0_i32_0 : i32, i32
  }
  func.func @transform_3(%arg0: i32) -> (i32, i32) {
    %c0_i32 = arith.constant 0 : i32
    %c0_i32_0 = arith.constant 0 : i32
    %c0_i32_1 = arith.constant 0 : i32
    return %c0_i32, %c0_i32_0 : i32, i32
  }
  func.func @transform_4(%arg0: i32) -> (i32, i32) {
    %c0_i32 = arith.constant 0 : i32
    %c0_i32_0 = arith.constant 0 : i32
    %c0_i32_1 = arith.constant 0 : i32
    return %c0_i32, %c0_i32_0 : i32, i32
  }
  func.func @transform_5(%arg0: i32) -> (i32, i32) {
    %c0_i32 = arith.constant 0 : i32
    %c0_i32_0 = arith.constant 0 : i32
    %c0_i32_1 = arith.constant 0 : i32
    return %c0_i32, %c0_i32_0 : i32, i32
  }
  func.func @transform_6(%arg0: i32) -> (i32, i32, i32) {
    %c0_i32 = arith.constant 0 : i32
    %c0_i32_0 = arith.constant 0 : i32
    %c0_i32_1 = arith.constant 0 : i32
    return %arg0, %c0_i32, %c0_i32_0 : i32, i32, i32
  }
  func.func @transform_7(%arg0: i32) -> (i32, i32, i32) {
    %c0_i32 = arith.constant 0 : i32
    %c0_i32_0 = arith.constant 0 : i32
    %c0_i32_1 = arith.constant 0 : i32
    return %arg0, %c0_i32, %c0_i32_0 : i32, i32, i32
  }
}

</mosaic_0001>

<llo_original>
// kernel: conv_down_forward.1
$region0: #{conv_down_forward.1}
  #allocation0 [shape = 'u32[]', space=smem, size = 0x4, offset = 0x4, fixed_abs, tag = 'smem constant byte address 0x4 - core index']
  #allocation1 [shape = 'u32[144,128]{1,0:T(1,128)}', space=vmem, size = 0x12000, scoped, tag = 'internal scratch']
  #allocation2 [shape = 'f32[72,384]{1,0:T(8,128)}', space=vmem, size = 0x1b000, scoped, tag = 'scratch operand']
  #allocation3 [shape = 'f32[8,384]{1,0:T(8,128)}', space=vmem, size = 0x3000, scoped, tag = 'scratch operand']
  #allocation4 [shape = 'f32[72,256]{1,0:T(8,128)}', space=vmem, size = 0x12000, scoped, tag = 'scratch operand']
  %s0 = inlined_call_operand.vmem [shape: f32[2,8,512], index: 0, kind: input, shape index: {}]
  %s1 = inlined_call_operand.vmem [shape: f32[8,72], index: 1, kind: input, shape index: {}]
  %s2 = inlined_call_operand.vmem [shape: f32[8,1], index: 2, kind: input, shape index: {}]
  %s3 = inlined_call_operand.vmem [shape: f32[8,72], index: 3, kind: input, shape index: {}]
  %s4 = inlined_call_operand.vmem [shape: f32[8,1], index: 4, kind: input, shape index: {}]
  %s5 = inlined_call_operand.vmem [shape: f32[192,128], index: 5, kind: input, shape index: {}]
  %s6 = inlined_call_operand.vmem [shape: f32[2,8,256], index: 6, kind: output, shape index: {0}]
  %s7 = inlined_call_operand.vmem [shape: f32[2,8,128], index: 7, kind: output, shape index: {1}]
  %8 = xla_tuple %s6, %s7
  %s9 = sld [smem:[#allocation0]]
  $region65: #{conv_down_forward.1} parent=0
    _
  %s11 = ssub.s32 1, %s9
  %s12 = scalar_select 0, %s11, %s9
  loop: start=0, step=1, limit=4
  $region2: #{conv_down_forward.1} parent=0 // loop_pre_header
    _
  $region3: #{conv_down_forward.1} parent=0 // loop_header
    %s14 = sphi 0, %s18
    %p15 = scmp.ge.s32.totalorder %s14, 4
    %s24 = sphi 0, %s26
    %s27 = sphi 0, %s24
    %s28 = sphi 0, %s27
    %s44 = sphi 0, %s28
    %s48 = sphi 0, %s48
    %s50 = sphi 0, %s48
    %s51 = sphi 0, %s50
    %s65 = sphi 0, %s51
    %s69 = sphi 0, %s69
    %s71 = sphi 0, %s69
    %s72 = sphi 0, %s71
    %s86 = sphi 0, %s72
    %s90 = sphi 0, %s90
    %s92 = sphi 0, %s90
    %s93 = sphi 0, %s92
    %s107 = sphi 0, %s93
    %s111 = sphi 0, %s111
    %s113 = sphi 0, %s111
    %s114 = sphi 0, %s113
    %s128 = sphi 0, %s114
    %s132 = sphi 0, %s132
    %s134 = sphi 0, %s132
    %s135 = sphi 0, %s134
    %s149 = sphi 0, %s135
    %s155 = sphi 0, %s157
    %s158 = sphi 0, %s155
    %s159 = sphi 0, %s158
    %s175 = sphi 0, %s159
    %s181 = sphi 0, %s183
    %s184 = sphi 0, %s181
    %s185 = sphi 0, %s184
    %s201 = sphi 0, %s185
  $region4: #{conv_down_forward.1} parent=0 // loop_header_branch
    %17 = sbr.rel (%p15) target = $region8
  $region5: #{conv_down_forward.1} parent=0 // loop_body
    %s19 = ssub.s32 %s14, 1
    %s20 = ssub.s32 %s14, 2
    %s21 = sadd.s32 %s14, 1
    %s22 = ssub.s32 %s14, %s21
    %p23 = scmp.eq.s32.totalorder %s22, 0
    %s25 = sadd.s32 %s24, 1
    %s26 = scalar_select %p23, %s24, %s25
    %p29 = pneg %p23
    %p30 = scmp.eq.s32.totalorder %s14, 1
    %p31 = por %p29, %p30
    %p32 = scmp.ne.s32.totalorder %s24, %s27
    %p33 = scmp.eq.s32.totalorder %s14, 0
    %p34 = por %p32, %p33
    %p35 = scmp.ne.s32.totalorder %s24, %s27
    %p36 = scmp.eq.s32.totalorder %s19, 1
    %p37 = por %p35, %p36
    %p38 = scmp.ne.s32.totalorder %s27, %s28
    %p39 = scmp.eq.s32.totalorder %s19, 0
    %p40 = por %p38, %p39
    %p41 = scmp.ne.s32.totalorder %s27, %s28
    %p42 = scmp.eq.s32.totalorder %s20, 1
    %p43 = por %p41, %p42
    %p45 = scmp.ne.s32.totalorder %s28, %s44
    %p46 = scmp.eq.s32.totalorder %s20, 0
    %p47 = por %p45, %p46
    %s49 = sadd.s32 %s48, 1
    %p52 = scmp.eq.s32.totalorder %s14, 1
    %p53 = scmp.ne.s32.totalorder %s48, %s50
    %p54 = scmp.eq.s32.totalorder %s14, 0
    %p55 = por %p53, %p54
    %p56 = scmp.ne.s32.totalorder %s48, %s50
    %p57 = scmp.eq.s32.totalorder %s19, 1
    %p58 = por %p56, %p57
    %p59 = scmp.ne.s32.totalorder %s50, %s51
    %p60 = scmp.eq.s32.totalorder %s19, 0
    %p61 = por %p59, %p60
    %p62 = scmp.ne.s32.totalorder %s50, %s51
    %p63 = scmp.eq.s32.totalorder %s20, 1
    %p64 = por %p62, %p63
    %p66 = scmp.ne.s32.totalorder %s51, %s65
    %p67 = scmp.eq.s32.totalorder %s20, 0
    %p68 = por %p66, %p67
    %s70 = sadd.s32 %s69, 1
    %p73 = scmp.eq.s32.totalorder %s14, 1
    %p74 = scmp.ne.s32.totalorder %s69, %s71
    %p75 = scmp.eq.s32.totalorder %s14, 0
    %p76 = por %p74, %p75
    %p77 = scmp.ne.s32.totalorder %s69, %s71
    %p78 = scmp.eq.s32.totalorder %s19, 1
    %p79 = por %p77, %p78
    %p80 = scmp.ne.s32.totalorder %s71, %s72
    %p81 = scmp.eq.s32.totalorder %s19, 0
    %p82 = por %p80, %p81
    %p83 = scmp.ne.s32.totalorder %s71, %s72
    %p84 = scmp.eq.s32.totalorder %s20, 1
    %p85 = por %p83, %p84
    %p87 = scmp.ne.s32.totalorder %s72, %s86
    %p88 = scmp.eq.s32.totalorder %s20, 0
    %p89 = por %p87, %p88
    %s91 = sadd.s32 %s90, 1
    %p94 = scmp.eq.s32.totalorder %s14, 1
    %p95 = scmp.ne.s32.totalorder %s90, %s92
    %p96 = scmp.eq.s32.totalorder %s14, 0
    %p97 = por %p95, %p96
    %p98 = scmp.ne.s32.totalorder %s90, %s92
    %p99 = scmp.eq.s32.totalorder %s19, 1
    %p100 = por %p98, %p99
    %p101 = scmp.ne.s32.totalorder %s92, %s93
    %p102 = scmp.eq.s32.totalorder %s19, 0
    %p103 = por %p101, %p102
    %p104 = scmp.ne.s32.totalorder %s92, %s93
    %p105 = scmp.eq.s32.totalorder %s20, 1
    %p106 = por %p104, %p105
    %p108 = scmp.ne.s32.totalorder %s93, %s107
    %p109 = scmp.eq.s32.totalorder %s20, 0
    %p110 = por %p108, %p109
    %s112 = sadd.s32 %s111, 1
    %p115 = scmp.eq.s32.totalorder %s14, 1
    %p116 = scmp.ne.s32.totalorder %s111, %s113
    %p117 = scmp.eq.s32.totalorder %s14, 0
    %p118 = por %p116, %p117
    %p119 = scmp.ne.s32.totalorder %s111, %s113
    %p120 = scmp.eq.s32.totalorder %s19, 1
    %p121 = por %p119, %p120
    %p122 = scmp.ne.s32.totalorder %s113, %s114
    %p123 = scmp.eq.s32.totalorder %s19, 0
    %p124 = por %p122, %p123
    %p125 = scmp.ne.s32.totalorder %s113, %s114
    %p126 = scmp.eq.s32.totalorder %s20, 1
    %p127 = por %p125, %p126
    %p129 = scmp.ne.s32.totalorder %s114, %s128
    %p130 = scmp.eq.s32.totalorder %s20, 0
    %p131 = por %p129, %p130
    %s133 = sadd.s32 %s132, 1
    %p136 = scmp.eq.s32.totalorder %s14, 1
    %p137 = scmp.ne.s32.totalorder %s132, %s134
    %p138 = scmp.eq.s32.totalorder %s14, 0
    %p139 = por %p137, %p138
    %p140 = scmp.ne.s32.totalorder %s132, %s134
    %p141 = scmp.eq.s32.totalorder %s19, 1
    %p142 = por %p140, %p141
    %p143 = scmp.ne.s32.totalorder %s134, %s135
    %p144 = scmp.eq.s32.totalorder %s19, 0
    %p145 = por %p143, %p144
    %p146 = scmp.ne.s32.totalorder %s134, %s135
    %p147 = scmp.eq.s32.totalorder %s20, 1
    %p148 = por %p146, %p147
    %p150 = scmp.ne.s32.totalorder %s135, %s149
    %p151 = scmp.eq.s32.totalorder %s20, 0
    %p152 = por %p150, %p151
    %s153 = ssub.s32 %s14, %s21
    %p154 = scmp.eq.s32.totalorder %s153, 0
    %s156 = sadd.s32 %s155, 1
    %s157 = scalar_select %p154, %s155, %s156
    %p160 = pneg %p154
    %p161 = scmp.eq.s32.totalorder %s14, 1
    %p162 = por %p160, %p161
    %p163 = scmp.ne.s32.totalorder %s155, %s158
    %p164 = scmp.eq.s32.totalorder %s14, 0
    %p165 = por %p163, %p164
    %p166 = scmp.ne.s32.totalorder %s155, %s158
    %p167 = scmp.eq.s32.totalorder %s19, 1
    %p168 = por %p166, %p167
    %p169 = scmp.ne.s32.totalorder %s158, %s159
    %p170 = scmp.eq.s32.totalorder %s19, 0
    %p171 = por %p169, %p170
    %p172 = scmp.ne.s32.totalorder %s158, %s159
    %p173 = scmp.eq.s32.totalorder %s20, 1
    %p174 = por %p172, %p173
    %p176 = scmp.ne.s32.totalorder %s159, %s175
    %p177 = scmp.eq.s32.totalorder %s20, 0
    %p178 = por %p176, %p177
    %s179 = ssub.s32 %s14, %s21
    %p180 = scmp.eq.s32.totalorder %s179, 0
    %s182 = sadd.s32 %s181, 1
    %s183 = scalar_select %p180, %s181, %s182
    %p186 = pneg %p180
    %p187 = scmp.eq.s32.totalorder %s14, 1
    %p188 = por %p186, %p187
    %p189 = scmp.ne.s32.totalorder %s181, %s184
    %p190 = scmp.eq.s32.totalorder %s14, 0
    %p191 = por %p189, %p190
    %p192 = scmp.ne.s32.totalorder %s181, %s184
    %p193 = scmp.eq.s32.totalorder %s19, 1
    %p194 = por %p192, %p193
    %p195 = scmp.ne.s32.totalorder %s184, %s185
    %p196 = scmp.eq.s32.totalorder %s19, 0
    %p197 = por %p195, %p196
    %p198 = scmp.ne.s32.totalorder %s184, %s185
    %p199 = scmp.eq.s32.totalorder %s20, 1
    %p200 = por %p198, %p199
    %p202 = scmp.ne.s32.totalorder %s185, %s201
    %p203 = scmp.eq.s32.totalorder %s20, 0
    %p204 = por %p202, %p203
    %p205 = scmp.le.s32.totalorder 1, %s14
    %p206 = scmp.lt.s32.totalorder %s14, 3
    %p207 = pnand %p205, %p206
    %p208 = pneg %p207
    // Predicated region
    $region9: #{conv_down_forward.1} parent=5 // pred_check
      _
    $region10: #{conv_down_forward.1} parent=5 // pred_check_branch
      %210 = sbr.rel (%p207) target = $region12
    $region11: #{conv_down_forward.1} parent=5 // pred_region
      %s211 = ssub.s32 %s14, 1
      // Predicated region
      $region13: #{conv_down_forward.1} parent=11 // pred_check
        %p212 = pneg %p61
      $region14: #{conv_down_forward.1} parent=11 // pred_check_branch
        %214 = sbr.rel (%p212) target = $region16
      $region15: #{conv_down_forward.1} parent=11 // pred_region
        _
      $region16: #{conv_down_forward.1} parent=11 // pred_fallthru
        _
      // Predicated region
      $region17: #{conv_down_forward.1} parent=11 // pred_check
        %p215 = pneg %p82
      $region18: #{conv_down_forward.1} parent=11 // pred_check_branch
        %217 = sbr.rel (%p215) target = $region20
      $region19: #{conv_down_forward.1} parent=11 // pred_region
        _
      $region20: #{conv_down_forward.1} parent=11 // pred_fallthru
        _
      // Predicated region
      $region21: #{conv_down_forward.1} parent=11 // pred_check
        %p218 = pneg %p103
      $region22: #{conv_down_forward.1} parent=11 // pred_check_branch
        %220 = sbr.rel (%p218) target = $region24
      $region23: #{conv_down_forward.1} parent=11 // pred_region
        _
      $region24: #{conv_down_forward.1} parent=11 // pred_fallthru
        _
      // Predicated region
      $region25: #{conv_down_forward.1} parent=11 // pred_check
        %p221 = pneg %p124
      $region26: #{conv_down_forward.1} parent=11 // pred_check_branch
        %223 = sbr.rel (%p221) target = $region28
      $region27: #{conv_down_forward.1} parent=11 // pred_region
        _
      $region28: #{conv_down_forward.1} parent=11 // pred_fallthru
        _
      // Predicated region
      $region29: #{conv_down_forward.1} parent=11 // pred_check
        %p224 = pneg %p145
      $region30: #{conv_down_forward.1} parent=11 // pred_check_branch
        %226 = sbr.rel (%p224) target = $region32
      $region31: #{conv_down_forward.1} parent=11 // pred_region
        _
      $region32: #{conv_down_forward.1} parent=11 // pred_fallthru
        _
    $region12: #{conv_down_forward.1} parent=5 // pred_fallthru
      _
    %p227 = scmp.lt.s32.totalorder %s14, 2
    // Predicated region
    $region33: #{conv_down_forward.1} parent=5 // pred_check
      %p228 = pneg %p227
    $region34: #{conv_down_forward.1} parent=5 // pred_check_branch
      %230 = sbr.rel (%p228) target = $region36
    $region35: #{conv_down_forward.1} parent=5 // pred_region
      // Predicated region
      $region37: #{conv_down_forward.1} parent=35 // pred_check
        %p231 = pneg %p34
      $region38: #{conv_down_forward.1} parent=35 // pred_check_branch
        %233 = sbr.rel (%p231) target = $region40
      $region39: #{conv_down_forward.1} parent=35 // pred_region
        %p234 = scmp.lt.s32.totalorder %s14, 1
        %s235 = scalar_select %p234, %s14, 1
        %s236 = smul.addr %s235, 4
        %s237 = smul.addr %s236, 8
        %s238 = scalar_lea.vmem %s0, %s237
      $region40: #{conv_down_forward.1} parent=35 // pred_fallthru
        _
    $region36: #{conv_down_forward.1} parent=5 // pred_fallthru
      _
    %p239 = scmp.le.s32.totalorder 1, %s14
    %p240 = scmp.lt.s32.totalorder %s14, 3
    %p241 = pnand %p239, %p240
    %p242 = pneg %p241
    // Predicated region
    $region41: #{conv_down_forward.1} parent=5 // pred_check
      _
    $region42: #{conv_down_forward.1} parent=5 // pred_check_branch
      %244 = sbr.rel (%p241) target = $region44
    $region43: #{conv_down_forward.1} parent=5 // pred_region
      %s245 = ssub.s32 %s14, 1
      %p246 = scmp.lt.s32.totalorder %s19, 1
      %s247 = scalar_select %p246, %s19, 1
      %s248 = smul.addr %s247, 4
      %s249 = smul.addr %s248, 8
      %s250 = scalar_lea.vmem %s0, %s249
      %p251 = pneg %p40
      %p252 = pneg %p37
      %p253 = pneg %p61
      %p254 = pneg %p58
      %p255 = pneg %p82
      %p256 = pneg %p79
      %p257 = pneg %p103
      %p258 = pneg %p100
      %p259 = pneg %p124
      %p260 = pneg %p121
      %p261 = pneg %p145
      %p262 = pneg %p142
      %p263 = pneg %p171
      %p264 = pneg %p168
      %p265 = scmp.lt.s32.totalorder %s19, 1
      %s266 = scalar_select %p265, %s19, 1
      %s267 = smul.addr %s266, 2
      %s268 = smul.addr %s267, 8
      %s269 = scalar_lea.vmem %s6, %s268
      %p270 = pneg %p197
      %p271 = pneg %p194
      %p272 = scmp.lt.s32.totalorder %s19, 1
      %s273 = scalar_select %p272, %s19, 1
      %s274 = smul.addr %s273, 8
      %s275 = scalar_lea.vmem %s7, %s274
      %p276 = scmp.lt.s32.totalorder %s19, 1
      %s277 = scalar_select %p276, %s19, 1
      %s278 = smul.addr %s277, 4
      %s279 = smul.addr %s278, 8
      %s280 = scalar_lea.vmem %s0, %s279
      %p281 = scmp.lt.s32.totalorder %s19, 1
      %s282 = scalar_select %p281, %s19, 1
      %s283 = smul.addr %s282, 2
      %s284 = smul.addr %s283, 8
      %s285 = scalar_lea.vmem %s6, %s284
      %p286 = scmp.lt.s32.totalorder %s19, 1
      %s287 = scalar_select %p286, %s19, 1
      %s288 = smul.addr %s287, 8
      %s289 = scalar_lea.vmem %s7, %s288
      %v290 = vld [vmem:[%s280] sm:$0xff]
      %v291 = vld [vmem:[%s280 + $0x8] sm:$0xff]
      %v292 = vld [vmem:[%s280 + $0x10] sm:$0xff]
      %293 = vst [vmem:[#allocation2] sm:$0xff] %v290
      %294 = vst [vmem:[#allocation2 + $0x8] sm:$0xff] %v291
      %295 = vst [vmem:[#allocation2 + $0x10] sm:$0xff] %v292
      %v296 = vld [vmem:[%s280] sm:$0xff]
      %v297 = vld [vmem:[%s280 + $0x8] sm:$0xff]
      %v298 = vld [vmem:[%s280 + $0x10] sm:$0xff]
      %v299 = vld [vmem:[%s280 + $0x18] sm:$0xff]
      %304 = vrot.lane.b32.xlu0 %v296, 127
      %v305 = vpop.permute.xlu0 %304
      %306 = vrot.lane.b32.xlu0 %v297, 127
      %v307 = vpop.permute.xlu0 %306
      %308 = vrot.lane.b32.xlu0 %v298, 127
      %v309 = vpop.permute.xlu0 %308
      %310 = vrot.lane.b32.xlu0 %v299, 127
      %v311 = vpop.permute.xlu0 %310
      %vm312 = vcmask 1039360
      %v313 = vsel %vm312, %v305, %v307
      %v314 = vsel %vm312, %v307, %v309
      %v315 = vsel %vm312, %v309, %v311
      %319 = vst [vmem:[#allocation2 + $0x18] sm:$0xff] %v313
      %320 = vst [vmem:[#allocation2 + $0x20] sm:$0xff] %v314
      %321 = vst [vmem:[#allocation2 + $0x28] sm:$0xff] %v315
      %v322 = vld [vmem:[%s280] sm:$0xff]
      %v323 = vld [vmem:[%s280 + $0x8] sm:$0xff]
      %v324 = vld [vmem:[%s280 + $0x10] sm:$0xff]
      %v325 = vld [vmem:[%s280 + $0x18] sm:$0xff]
      %330 = vrot.lane.b32.xlu0 %v322, 126
      %v331 = vpop.permute.xlu0 %330
      %332 = vrot.lane.b32.xlu0 %v323, 126
      %v333 = vpop.permute.xlu0 %332
      %334 = vrot.lane.b32.xlu0 %v324, 126
      %v335 = vpop.permute.xlu0 %334
      %336 = vrot.lane.b32.xlu0 %v325, 126
      %v337 = vpop.permute.xlu0 %336
      %vm338 = vcmask 1031168
      %v339 = vsel %vm338, %v331, %v333
      %v340 = vsel %vm338, %v333, %v335
      %v341 = vsel %vm338, %v335, %v337
      %345 = vst [vmem:[#allocation2 + $0x30] sm:$0xff] %v339
      %346 = vst [vmem:[#allocation2 + $0x38] sm:$0xff] %v340
      %347 = vst [vmem:[#allocation2 + $0x40] sm:$0xff] %v341
      %v348 = vld [vmem:[%s280] sm:$0xff]
      %v349 = vld [vmem:[%s280 + $0x8] sm:$0xff]
      %v350 = vld [vmem:[%s280 + $0x10] sm:$0xff]
      %v351 = vld [vmem:[%s280 + $0x18] sm:$0xff]
      %356 = vrot.lane.b32.xlu0 %v348, 112
      %v357 = vpop.permute.xlu0 %356
      %358 = vrot.lane.b32.xlu0 %v349, 112
      %v359 = vpop.permute.xlu0 %358
      %360 = vrot.lane.b32.xlu0 %v350, 112
      %v361 = vpop.permute.xlu0 %360
      %362 = vrot.lane.b32.xlu0 %v351, 112
      %v363 = vpop.permute.xlu0 %362
      %vm364 = vcmask 916480
      %v365 = vsel %vm364, %v357, %v359
      %v366 = vsel %vm364, %v359, %v361
      %v367 = vsel %vm364, %v361, %v363
      %371 = vst [vmem:[#allocation2 + $0x48] sm:$0xff] %v365
      %372 = vst [vmem:[#allocation2 + $0x50] sm:$0xff] %v366
      %373 = vst [vmem:[#allocation2 + $0x58] sm:$0xff] %v367
      %v374 = vld [vmem:[%s280] sm:$0xff]
      %v375 = vld [vmem:[%s280 + $0x8] sm:$0xff]
      %v376 = vld [vmem:[%s280 + $0x10] sm:$0xff]
      %v377 = vld [vmem:[%s280 + $0x18] sm:$0xff]
      %382 = vrot.lane.b32.xlu0 %v374, 111
      %v383 = vpop.permute.xlu0 %382
      %384 = vrot.lane.b32.xlu0 %v375, 111
      %v385 = vpop.permute.xlu0 %384
      %386 = vrot.lane.b32.xlu0 %v376, 111
      %v387 = vpop.permute.xlu0 %386
      %388 = vrot.lane.b32.xlu0 %v377, 111
      %v389 = vpop.permute.xlu0 %388
      %vm390 = vcmask 908288
      %v391 = vsel %vm390, %v383, %v385
      %v392 = vsel %vm390, %v385, %v387
      %v393 = vsel %vm390, %v387, %v389
      %397 = vst [vmem:[#allocation2 + $0x60] sm:$0xff] %v391
      %398 = vst [vmem:[#allocation2 + $0x68] sm:$0xff] %v392
      %399 = vst [vmem:[#allocation2 + $0x70] sm:$0xff] %v393
      %v400 = vld [vmem:[%s280] sm:$0xff]
      %v401 = vld [vmem:[%s280 + $0x8] sm:$0xff]
      %v402 = vld [vmem:[%s280 + $0x10] sm:$0xff]
      %v403 = vld [vmem:[%s280 + $0x18] sm:$0xff]
      %408 = vrot.lane.b32.xlu0 %v400, 110
      %v409 = vpop.permute.xlu0 %408
      %410 = vrot.lane.b32.xlu0 %v401, 110
      %v411 = vpop.permute.xlu0 %410
      %412 = vrot.lane.b32.xlu0 %v402, 110
      %v413 = vpop.permute.xlu0 %412
      %414 = vrot.lane.b32.xlu0 %v403, 110
      %v415 = vpop.permute.xlu0 %414
      %vm416 = vcmask 900096
      %v417 = vsel %vm416, %v409, %v411
      %v418 = vsel %vm416, %v411, %v413
      %v419 = vsel %vm416, %v413, %v415
      %423 = vst [vmem:[#allocation2 + $0x78] sm:$0xff] %v417
      %424 = vst [vmem:[#allocation2 + $0x80] sm:$0xff] %v418
      %425 = vst [vmem:[#allocation2 + $0x88] sm:$0xff] %v419
      %v426 = vld [vmem:[%s280] sm:$0xff]
      %v427 = vld [vmem:[%s280 + $0x8] sm:$0xff]
      %v428 = vld [vmem:[%s280 + $0x10] sm:$0xff]
      %v429 = vld [vmem:[%s280 + $0x18] sm:$0xff]
      %434 = vrot.lane.b32.xlu0 %v426, 96
      %v435 = vpop.permute.xlu0 %434
      %436 = vrot.lane.b32.xlu0 %v427, 96
      %v437 = vpop.permute.xlu0 %436
      %438 = vrot.lane.b32.xlu0 %v428, 96
      %v439 = vpop.permute.xlu0 %438
      %440 = vrot.lane.b32.xlu0 %v429, 96
      %v441 = vpop.permute.xlu0 %440
      %vm442 = vcmask 785408
      %v443 = vsel %vm442, %v435, %v437
      %v444 = vsel %vm442, %v437, %v439
      %v445 = vsel %vm442, %v439, %v441
      %449 = vst [vmem:[#allocation2 + $0x90] sm:$0xff] %v443
      %450 = vst [vmem:[#allocation2 + $0x98] sm:$0xff] %v444
      %451 = vst [vmem:[#allocation2 + $0xa0] sm:$0xff] %v445
      %v452 = vld [vmem:[%s280] sm:$0xff]
      %v453 = vld [vmem:[%s280 + $0x8] sm:$0xff]
      %v454 = vld [vmem:[%s280 + $0x10] sm:$0xff]
      %v455 = vld [vmem:[%s280 + $0x18] sm:$0xff]
      %460 = vrot.lane.b32.xlu0 %v452, 95
      %v461 = vpop.permute.xlu0 %460
      %462 = vrot.lane.b32.xlu0 %v453, 95
      %v463 = vpop.permute.xlu0 %462
      %464 = vrot.lane.b32.xlu0 %v454, 95
      %v465 = vpop.permute.xlu0 %464
      %466 = vrot.lane.b32.xlu0 %v455, 95
      %v467 = vpop.permute.xlu0 %466
      %vm468 = vcmask 777216
      %v469 = vsel %vm468, %v461, %v463
      %v470 = vsel %vm468, %v463, %v465
      %v471 = vsel %vm468, %v465, %v467
      %475 = vst [vmem:[#allocation2 + $0xa8] sm:$0xff] %v469
      %476 = vst [vmem:[#allocation2 + $0xb0] sm:$0xff] %v470
      %477 = vst [vmem:[#allocation2 + $0xb8] sm:$0xff] %v471
      %v478 = vld [vmem:[%s280] sm:$0xff]
      %v479 = vld [vmem:[%s280 + $0x8] sm:$0xff]
      %v480 = vld [vmem:[%s280 + $0x10] sm:$0xff]
      %v481 = vld [vmem:[%s280 + $0x18] sm:$0xff]
      %486 = vrot.lane.b32.xlu0 %v478, 94
      %v487 = vpop.permute.xlu0 %486
      %488 = vrot.lane.b32.xlu0 %v479, 94
      %v489 = vpop.permute.xlu0 %488
      %490 = vrot.lane.b32.xlu0 %v480, 94
      %v491 = vpop.permute.xlu0 %490
      %492 = vrot.lane.b32.xlu0 %v481, 94
      %v493 = vpop.permute.xlu0 %492
      %vm494 = vcmask 769024
      %v495 = vsel %vm494, %v487, %v489
      %v496 = vsel %vm494, %v489, %v491
      %v497 = vsel %vm494, %v491, %v493
      %501 = vst [vmem:[#allocation2 + $0xc0] sm:$0xff] %v495
      %502 = vst [vmem:[#allocation2 + $0xc8] sm:$0xff] %v496
      %503 = vst [vmem:[#allocation2 + $0xd0] sm:$0xff] %v497
      %v504 = vld [vmem:[%s1] sm:$0xff]
      %v505 = vld [vmem:[#allocation2] sm:$0xff]
      %v506 = vld [vmem:[#allocation2 + $0x8] sm:$0xff]
      %v507 = vld [vmem:[#allocation2 + $0x10] sm:$0xff]
      %v508 = vld [vmem:[#allocation2 + $0x18] sm:$0xff]
      %v509 = vld [vmem:[#allocation2 + $0x20] sm:$0xff]
      %v510 = vld [vmem:[#allocation2 + $0x28] sm:$0xff]
      %v511 = vld [vmem:[#allocation2 + $0x30] sm:$0xff]
      %v512 = vld [vmem:[#allocation2 + $0x38] sm:$0xff]
      %v513 = vld [vmem:[#allocation2 + $0x40] sm:$0xff]
      %v514 = vld [vmem:[#allocation2 + $0x48] sm:$0xff]
      %v515 = vld [vmem:[#allocation2 + $0x50] sm:$0xff]
      %v516 = vld [vmem:[#allocation2 + $0x58] sm:$0xff]
      %v517 = vld [vmem:[#allocation2 + $0x60] sm:$0xff]
      %v518 = vld [vmem:[#allocation2 + $0x68] sm:$0xff]
      %v519 = vld [vmem:[#allocation2 + $0x70] sm:$0xff]
      %v520 = vld [vmem:[#allocation2 + $0x78] sm:$0xff]
      %v521 = vld [vmem:[#allocation2 + $0x80] sm:$0xff]
      %v522 = vld [vmem:[#allocation2 + $0x88] sm:$0xff]
      %v523 = vld [vmem:[#allocation2 + $0x90] sm:$0xff]
      %v524 = vld [vmem:[#allocation2 + $0x98] sm:$0xff]
      %v525 = vld [vmem:[#allocation2 + $0xa0] sm:$0xff]
      %v526 = vld [vmem:[#allocation2 + $0xa8] sm:$0xff]
      %v527 = vld [vmem:[#allocation2 + $0xb0] sm:$0xff]
      %v528 = vld [vmem:[#allocation2 + $0xb8] sm:$0xff]
      %v529 = vld [vmem:[#allocation2 + $0xc0] sm:$0xff]
      %v530 = vld [vmem:[#allocation2 + $0xc8] sm:$0xff]
      %v531 = vld [vmem:[#allocation2 + $0xd0] sm:$0xff]
      %v532 = vld [vmem:[%s2] sm:$0xff]
      %534 = vset.pattern.permute.xlu0 0
      %535 = vperm.xlu0 %534, %v532
      %v536 = vpop.permute.xlu0 %535
      %vm538 = vcmask 588800
      %v540 = vsel %vm538, %v504, 0
      %542 = vmatprep.subr.mxu0 %v506
      %543 = vmatpush1.msra.mxu0 %v505
      %544 = vmatprep.subr.mxu0 %v509
      %545 = vmatpush1.msra.mxu0 %v508
      %546 = vmatprep.subr.mxu0 %v512
      %547 = vmatpush1.msra.mxu0 %v511
      %548 = vmatprep.subr.mxu0 %v515
      %549 = vmatpush1.msra.mxu0 %v514
      %550 = vmatprep.subr.mxu0 %v518
      %551 = vmatpush1.msra.mxu0 %v517
      %552 = vmatprep.subr.mxu0 %v521
      %553 = vmatpush1.msra.mxu0 %v520
      %554 = vmatprep.subr.mxu0 %v524
      %555 = vmatpush1.msra.mxu0 %v523
      %556 = vmatprep.subr.mxu0 %v527
      %557 = vmatpush1.msra.mxu0 %v526
      %558 = vmatprep.subr.mxu0 %v530
      %559 = vmatpush1.msra.mxu0 %v529
      %560 = vmatprep.subr.mxu0 0.0
      %561 = vmatpush1.msra.mxu0 0.0
      %562 = vmatprep.subr.mxu0 0.0
      %563 = vmatpush1.msra.mxu0 0.0
      %564 = vmatprep.subr.mxu0 0.0
      %565 = vmatpush1.msra.mxu0 0.0
      %566 = vmatprep.subr.mxu0 0.0
      %567 = vmatpush1.msra.mxu0 0.0
      %568 = vmatprep.subr.mxu0 0.0
      %569 = vmatpush1.msra.mxu0 0.0
      %570 = vmatprep.subr.mxu0 0.0
      %571 = vmatpush1.msra.mxu0 0.0
      %572 = vmatprep.subr.mxu0 0.0
      %573 = vmatpush1.msra.mxu0 0.0
      %574 = vmatprep.subr.mxu0 0.0
      %575 = vmatpush1.msra.mxu0 0.0
      %576 = vmatprep.subr.mxu0 0.0
      %577 = vmatpush1.msra.mxu0 0.0
      %578 = vmatprep.subr.mxu0 0.0
      %579 = vmatpush1.msra.mxu0 0.0
      %580 = vmatprep.subr.mxu0 0.0
      %581 = vmatpush1.msra.mxu0 0.0
      %582 = vmatprep.subr.mxu0 0.0
      %583 = vmatpush1.msra.mxu0 0.0
      %584 = vmatprep.subr.mxu0 0.0
      %585 = vmatpush1.msra.mxu0 0.0
      %586 = vmatprep.subr.mxu0 0.0
      %587 = vmatpush1.msra.mxu0 0.0
      %588 = vmatprep.subr.mxu0 0.0
      %589 = vmatpush1.msra.mxu0 0.0
      %590 = vmatprep.subr.mxu0 0.0
      %591 = vmatpush1.msra.mxu0 0.0
      %592 = vmatprep.subr.mxu0 0.0
      %593 = vmatpush1.msra.mxu0 0.0
      %594 = vmatprep.subr.mxu0 0.0
      %595 = vmatpush1.msra.mxu0 0.0
      %596 = vmatprep.subr.mxu0 0.0
      %597 = vmatpush1.msra.mxu0 0.0
      %598 = vmatprep.subr.mxu0 0.0
      %599 = vmatpush1.msra.mxu0 0.0
      %600 = vmatprep.subr.mxu0 0.0
      %601 = vmatpush1.msra.mxu0 0.0
      %602 = vmatprep.subr.mxu0 0.0
      %603 = vmatpush1.msra.mxu0 0.0
      %604 = vmatprep.subr.mxu0 0.0
      %605 = vmatpush1.msra.mxu0 0.0
      %606 = vmatprep.mubr.f32.mxu0 0.0
      %607 = vmatmul.mubr.f32.gmra.mrb[0].mxu0 %v540
      %v608 = vpop.f32.mrb[0].mxu0
      %v609 = vadd.f32 %v536, %v608
      %v610 = vpop.f32.mrb[0].mxu0
      %v611 = vadd.f32 %v536, %v610
      %612 = vdwg.mxu0
      %613 = vmatprep.subr.mxu0 0.0
      %614 = vmatpush1.msra.mxu0 %v507
      %615 = vmatprep.subr.mxu0 0.0
      %616 = vmatpush1.msra.mxu0 %v510
      %617 = vmatprep.subr.mxu0 0.0
      %618 = vmatpush1.msra.mxu0 %v513
      %619 = vmatprep.subr.mxu0 0.0
      %620 = vmatpush1.msra.mxu0 %v516
      %621 = vmatprep.subr.mxu0 0.0
      %622 = vmatpush1.msra.mxu0 %v519
      %623 = vmatprep.subr.mxu0 0.0
      %624 = vmatpush1.msra.mxu0 %v522
      %625 = vmatprep.subr.mxu0 0.0
      %626 = vmatpush1.msra.mxu0 %v525
      %627 = vmatprep.subr.mxu0 0.0
      %628 = vmatpush1.msra.mxu0 %v528
      %629 = vmatprep.subr.mxu0 0.0
      %630 = vmatpush1.msra.mxu0 %v531
      %631 = vmatprep.subr.mxu0 0.0
      %632 = vmatpush1.msra.mxu0 0.0
      %633 = vmatprep.subr.mxu0 0.0
      %634 = vmatpush1.msra.mxu0 0.0
      %635 = vmatprep.subr.mxu0 0.0
      %636 = vmatpush1.msra.mxu0 0.0
      %637 = vmatprep.subr.mxu0 0.0
      %638 = vmatpush1.msra.mxu0 0.0
      %639 = vmatprep.subr.mxu0 0.0
      %640 = vmatpush1.msra.mxu0 0.0
      %641 = vmatprep.subr.mxu0 0.0
      %642 = vmatpush1.msra.mxu0 0.0
      %643 = vmatprep.subr.mxu0 0.0
      %644 = vmatpush1.msra.mxu0 0.0
      %645 = vmatprep.subr.mxu0 0.0
      %646 = vmatpush1.msra.mxu0 0.0
      %647 = vmatprep.subr.mxu0 0.0
      %648 = vmatpush1.msra.mxu0 0.0
      %649 = vmatprep.subr.mxu0 0.0
      %650 = vmatpush1.msra.mxu0 0.0
      %651 = vmatprep.subr.mxu0 0.0
      %652 = vmatpush1.msra.mxu0 0.0
      %653 = vmatprep.subr.mxu0 0.0
      %654 = vmatpush1.msra.mxu0 0.0
      %655 = vmatprep.subr.mxu0 0.0
      %656 = vmatpush1.msra.mxu0 0.0
      %657 = vmatprep.subr.mxu0 0.0
      %658 = vmatpush1.msra.mxu0 0.0
      %659 = vmatprep.subr.mxu0 0.0
      %660 = vmatpush1.msra.mxu0 0.0
      %661 = vmatprep.subr.mxu0 0.0
      %662 = vmatpush1.msra.mxu0 0.0
      %663 = vmatprep.subr.mxu0 0.0
      %664 = vmatpush1.msra.mxu0 0.0
      %665 = vmatprep.subr.mxu0 0.0
      %666 = vmatpush1.msra.mxu0 0.0
      %667 = vmatprep.subr.mxu0 0.0
      %668 = vmatpush1.msra.mxu0 0.0
      %669 = vmatprep.subr.mxu0 0.0
      %670 = vmatpush1.msra.mxu0 0.0
      %671 = vmatprep.subr.mxu0 0.0
      %672 = vmatpush1.msra.mxu0 0.0
      %673 = vmatprep.subr.mxu0 0.0
      %674 = vmatpush1.msra.mxu0 0.0
      %675 = vmatprep.subr.mxu0 0.0
      %676 = vmatpush1.msra.mxu0 0.0
      %677 = vmatprep.mubr.f32.mxu0 0.0
      %678 = vmatmul.mubr.f32.gmra.mrb[0].mxu0 %v540
      %v679 = vpop.f32.mrb[0].mxu0
      %v680 = vadd.f32 %v536, %v679
      %v681 = vpop.f32.mrb[0].mxu0
      %682 = vdwg.mxu0
      %v683 = vmax.f32 %v609, 0.0
      %v684 = vmax.f32 %v611, 0.0
      %v685 = vmax.f32 %v680, 0.0
      %686 = vst [vmem:[#allocation3] sm:$0xff] %v683
      %687 = vst [vmem:[#allocation3 + $0x8] sm:$0xff] %v684
      %688 = vst [vmem:[#allocation3 + $0x10] sm:$0xff] %v685
      %v689 = vld [vmem:[#allocation3] sm:$0xff]
      %v690 = vld [vmem:[#allocation3 + $0x8] sm:$0xff]
      %691 = vst [vmem:[#allocation4] sm:$0xff] %v689
      %692 = vst [vmem:[#allocation4 + $0x8] sm:$0xff] %v690
      %v693 = vld [vmem:[#allocation3] sm:$0xff]
      %v694 = vld [vmem:[#allocation3 + $0x8] sm:$0xff]
      %v695 = vld [vmem:[#allocation3 + $0x10] sm:$0xff]
      %699 = vrot.lane.b32.xlu0 %v693, 127
      %v700 = vpop.permute.xlu0 %699
      %701 = vrot.lane.b32.xlu0 %v694, 127
      %v702 = vpop.permute.xlu0 %701
      %703 = vrot.lane.b32.xlu0 %v695, 127
      %v704 = vpop.permute.xlu0 %703
      %v705 = vsel %vm312, %v700, %v702
      %v706 = vsel %vm312, %v702, %v704
      %709 = vst [vmem:[#allocation4 + $0x10] sm:$0xff] %v705
      %710 = vst [vmem:[#allocation4 + $0x18] sm:$0xff] %v706
      %v711 = vld [vmem:[#allocation3] sm:$0xff]
      %v712 = vld [vmem:[#allocation3 + $0x8] sm:$0xff]
      %v713 = vld [vmem:[#allocation3 + $0x10] sm:$0xff]
      %717 = vrot.lane.b32.xlu0 %v711, 126
      %v718 = vpop.permute.xlu0 %717
      %719 = vrot.lane.b32.xlu0 %v712, 126
      %v720 = vpop.permute.xlu0 %719
      %721 = vrot.lane.b32.xlu0 %v713, 126
      %v722 = vpop.permute.xlu0 %721
      %v723 = vsel %vm338, %v718, %v720
      %v724 = vsel %vm338, %v720, %v722
      %727 = vst [vmem:[#allocation4 + $0x20] sm:$0xff] %v723
      %728 = vst [vmem:[#allocation4 + $0x28] sm:$0xff] %v724
      %v729 = vld [vmem:[#allocation3] sm:$0xff]
      %v730 = vld [vmem:[#allocation3 + $0x8] sm:$0xff]
      %v731 = vld [vmem:[#allocation3 + $0x10] sm:$0xff]
      %735 = vrot.lane.b32.xlu0 %v729, 112
      %v736 = vpop.permute.xlu0 %735
      %737 = vrot.lane.b32.xlu0 %v730, 112
      %v738 = vpop.permute.xlu0 %737
      %739 = vrot.lane.b32.xlu0 %v731, 112
      %v740 = vpop.permute.xlu0 %739
      %v741 = vsel %vm364, %v736, %v738
      %v742 = vsel %vm364, %v738, %v740
      %745 = vst [vmem:[#allocation4 + $0x30] sm:$0xff] %v741
      %746 = vst [vmem:[#allocation4 + $0x38] sm:$0xff] %v742
      %v747 = vld [vmem:[#allocation3] sm:$0xff]
      %v748 = vld [vmem:[#allocation3 + $0x8] sm:$0xff]
      %v749 = vld [vmem:[#allocation3 + $0x10] sm:$0xff]
      %753 = vrot.lane.b32.xlu0 %v747, 111
      %v754 = vpop.permute.xlu0 %753
      %755 = vrot.lane.b32.xlu0 %v748, 111
      %v756 = vpop.permute.xlu0 %755
      %757 = vrot.lane.b32.xlu0 %v749, 111
      %v758 = vpop.permute.xlu0 %757
      %v759 = vsel %vm390, %v754, %v756
      %v760 = vsel %vm390, %v756, %v758
      %763 = vst [vmem:[#allocation4 + $0x40] sm:$0xff] %v759
      %764 = vst [vmem:[#allocation4 + $0x48] sm:$0xff] %v760
      %v765 = vld [vmem:[#allocation3] sm:$0xff]
      %v766 = vld [vmem:[#allocation3 + $0x8] sm:$0xff]
      %v767 = vld [vmem:[#allocation3 + $0x10] sm:$0xff]
      %771 = vrot.lane.b32.xlu0 %v765, 110
      %v772 = vpop.permute.xlu0 %771
      %773 = vrot.lane.b32.xlu0 %v766, 110
      %v774 = vpop.permute.xlu0 %773
      %775 = vrot.lane.b32.xlu0 %v767, 110
      %v776 = vpop.permute.xlu0 %775
      %v777 = vsel %vm416, %v772, %v774
      %v778 = vsel %vm416, %v774, %v776
      %781 = vst [vmem:[#allocation4 + $0x50] sm:$0xff] %v777
      %782 = vst [vmem:[#allocation4 + $0x58] sm:$0xff] %v778
      %v783 = vld [vmem:[#allocation3] sm:$0xff]
      %v784 = vld [vmem:[#allocation3 + $0x8] sm:$0xff]
      %v785 = vld [vmem:[#allocation3 + $0x10] sm:$0xff]
      %789 = vrot.lane.b32.xlu0 %v783, 96
      %v790 = vpop.permute.xlu0 %789
      %791 = vrot.lane.b32.xlu0 %v784, 96
      %v792 = vpop.permute.xlu0 %791
      %793 = vrot.lane.b32.xlu0 %v785, 96
      %v794 = vpop.permute.xlu0 %793
      %v795 = vsel %vm442, %v790, %v792
      %v796 = vsel %vm442, %v792, %v794
      %799 = vst [vmem:[#allocation4 + $0x60] sm:$0xff] %v795
      %800 = vst [vmem:[#allocation4 + $0x68] sm:$0xff] %v796
      %v801 = vld [vmem:[#allocation3] sm:$0xff]
      %v802 = vld [vmem:[#allocation3 + $0x8] sm:$0xff]
      %v803 = vld [vmem:[#allocation3 + $0x10] sm:$0xff]
      %807 = vrot.lane.b32.xlu0 %v801, 95
      %v808 = vpop.permute.xlu0 %807
      %809 = vrot.lane.b32.xlu0 %v802, 95
      %v810 = vpop.permute.xlu0 %809
      %811 = vrot.lane.b32.xlu0 %v803, 95
      %v812 = vpop.permute.xlu0 %811
      %v813 = vsel %vm468, %v808, %v810
      %v814 = vsel %vm468, %v810, %v812
      %817 = vst [vmem:[#allocation4 + $0x70] sm:$0xff] %v813
      %818 = vst [vmem:[#allocation4 + $0x78] sm:$0xff] %v814
      %v819 = vld [vmem:[#allocation3] sm:$0xff]
      %v820 = vld [vmem:[#allocation3 + $0x8] sm:$0xff]
      %v821 = vld [vmem:[#allocation3 + $0x10] sm:$0xff]
      %825 = vrot.lane.b32.xlu0 %v819, 94
      %v826 = vpop.permute.xlu0 %825
      %827 = vrot.lane.b32.xlu0 %v820, 94
      %v828 = vpop.permute.xlu0 %827
      %829 = vrot.lane.b32.xlu0 %v821, 94
      %v830 = vpop.permute.xlu0 %829
      %v831 = vsel %vm494, %v826, %v828
      %v832 = vsel %vm494, %v828, %v830
      %835 = vst [vmem:[#allocation4 + $0x80] sm:$0xff] %v831
      %836 = vst [vmem:[#allocation4 + $0x88] sm:$0xff] %v832
      %v837 = vld [vmem:[%s3] sm:$0xff]
      %v838 = vld [vmem:[#allocation4] sm:$0xff]
      %v839 = vld [vmem:[#allocation4 + $0x8] sm:$0xff]
      %v840 = vld [vmem:[#allocation4 + $0x10] sm:$0xff]
      %v841 = vld [vmem:[#allocation4 + $0x18] sm:$0xff]
      %v842 = vld [vmem:[#allocation4 + $0x20] sm:$0xff]
      %v843 = vld [vmem:[#allocation4 + $0x28] sm:$0xff]
      %v844 = vld [vmem:[#allocation4 + $0x30] sm:$0xff]
      %v845 = vld [vmem:[#allocation4 + $0x38] sm:$0xff]
      %v846 = vld [vmem:[#allocation4 + $0x40] sm:$0xff]
      %v847 = vld [vmem:[#allocation4 + $0x48] sm:$0xff]
      %v848 = vld [vmem:[#allocation4 + $0x50] sm:$0xff]
      %v849 = vld [vmem:[#allocation4 + $0x58] sm:$0xff]
      %v850 = vld [vmem:[#allocation4 + $0x60] sm:$0xff]
      %v851 = vld [vmem:[#allocation4 + $0x68] sm:$0xff]
      %v852 = vld [vmem:[#allocation4 + $0x70] sm:$0xff]
      %v853 = vld [vmem:[#allocation4 + $0x78] sm:$0xff]
      %v854 = vld [vmem:[#allocation4 + $0x80] sm:$0xff]
      %v855 = vld [vmem:[#allocation4 + $0x88] sm:$0xff]
      %v856 = vld [vmem:[%s4] sm:$0xff]
      %858 = vset.pattern.permute.xlu0 0
      %859 = vperm.xlu0 %858, %v856
      %v860 = vpop.permute.xlu0 %859
      %v863 = vsel %vm538, %v837, 0
      %865 = vmatprep.subr.mxu0 %v839
      %866 = vmatpush1.msra.mxu0 %v838
      %867 = vmatprep.subr.mxu0 %v841
      %868 = vmatpush1.msra.mxu0 %v840
      %869 = vmatprep.subr.mxu0 %v843
      %870 = vmatpush1.msra.mxu0 %v842
      %871 = vmatprep.subr.mxu0 %v845
      %872 = vmatpush1.msra.mxu0 %v844
      %873 = vmatprep.subr.mxu0 %v847
      %874 = vmatpush1.msra.mxu0 %v846
      %875 = vmatprep.subr.mxu0 %v849
      %876 = vmatpush1.msra.mxu0 %v848
      %877 = vmatprep.subr.mxu0 %v851
      %878 = vmatpush1.msra.mxu0 %v850
      %879 = vmatprep.subr.mxu0 %v853
      %880 = vmatpush1.msra.mxu0 %v852
      %881 = vmatprep.subr.mxu0 %v855
      %882 = vmatpush1.msra.mxu0 %v854
      %883 = vmatprep.subr.mxu0 0.0
      %884 = vmatpush1.msra.mxu0 0.0
      %885 = vmatprep.subr.mxu0 0.0
      %886 = vmatpush1.msra.mxu0 0.0
      %887 = vmatprep.subr.mxu0 0.0
      %888 = vmatpush1.msra.mxu0 0.0
      %889 = vmatprep.subr.mxu0 0.0
      %890 = vmatpush1.msra.mxu0 0.0
      %891 = vmatprep.subr.mxu0 0.0
      %892 = vmatpush1.msra.mxu0 0.0
      %893 = vmatprep.subr.mxu0 0.0
      %894 = vmatpush1.msra.mxu0 0.0
      %895 = vmatprep.subr.mxu0 0.0
      %896 = vmatpush1.msra.mxu0 0.0
      %897 = vmatprep.subr.mxu0 0.0
      %898 = vmatpush1.msra.mxu0 0.0
      %899 = vmatprep.subr.mxu0 0.0
      %900 = vmatpush1.msra.mxu0 0.0
      %901 = vmatprep.subr.mxu0 0.0
      %902 = vmatpush1.msra.mxu0 0.0
      %903 = vmatprep.subr.mxu0 0.0
      %904 = vmatpush1.msra.mxu0 0.0
      %905 = vmatprep.subr.mxu0 0.0
      %906 = vmatpush1.msra.mxu0 0.0
      %907 = vmatprep.subr.mxu0 0.0
      %908 = vmatpush1.msra.mxu0 0.0
      %909 = vmatprep.subr.mxu0 0.0
      %910 = vmatpush1.msra.mxu0 0.0
      %911 = vmatprep.subr.mxu0 0.0
      %912 = vmatpush1.msra.mxu0 0.0
      %913 = vmatprep.subr.mxu0 0.0
      %914 = vmatpush1.msra.mxu0 0.0
      %915 = vmatprep.subr.mxu0 0.0
      %916 = vmatpush1.msra.mxu0 0.0
      %917 = vmatprep.subr.mxu0 0.0
      %918 = vmatpush1.msra.mxu0 0.0
      %919 = vmatprep.subr.mxu0 0.0
      %920 = vmatpush1.msra.mxu0 0.0
      %921 = vmatprep.subr.mxu0 0.0
      %922 = vmatpush1.msra.mxu0 0.0
      %923 = vmatprep.subr.mxu0 0.0
      %924 = vmatpush1.msra.mxu0 0.0
      %925 = vmatprep.subr.mxu0 0.0
      %926 = vmatpush1.msra.mxu0 0.0
      %927 = vmatprep.subr.mxu0 0.0
      %928 = vmatpush1.msra.mxu0 0.0
      %929 = vmatprep.mubr.f32.mxu0 0.0
      %930 = vmatmul.mubr.f32.gmra.mrb[0].mxu0 %v863
      %v931 = vpop.f32.mrb[0].mxu0
      %v932 = vadd.f32 %v860, %v931
      %v933 = vpop.f32.mrb[0].mxu0
      %v934 = vadd.f32 %v860, %v933
      %935 = vdwg.mxu0
      %v936 = vmax.f32 %v932, 0.0
      %v937 = vmax.f32 %v934, 0.0
      %938 = vst [vmem:[%s285] sm:$0xff] %v936
      %939 = vst [vmem:[%s285 + $0x8] sm:$0xff] %v937
      %942 = vrot.lane.b32.xlu0 %v936, 127
      %v943 = vpop.permute.xlu0 %942
      %944 = vrot.lane.b32.xlu0 %v937, 127
      %v945 = vpop.permute.xlu0 %944
      %v946 = vsel %vm312, %v943, %v945
      %v949 = vmax.f32 %v936, %v946
      %v950 = vmax.f32 %v937, %v945
      %953 = vrot.lane.b32.xlu0 %v949, 112
      %v954 = vpop.permute.xlu0 %953
      %955 = vrot.lane.b32.xlu0 %v950, 112
      %v956 = vpop.permute.xlu0 %955
      %v957 = vsel %vm364, %v954, %v956
      %v960 = vmax.f32 %v949, %v957
      %v961 = vmax.f32 %v950, %v956
      %v962 = vld [vmem:[%s5] sm:$0xff]
      %v963 = vld [vmem:[%s5 + $0x8] sm:$0xff]
      %v964 = vld [vmem:[%s5 + $0x10] sm:$0xff]
      %v965 = vld [vmem:[%s5 + $0x18] sm:$0xff]
      %v966 = vld [vmem:[%s5 + $0x20] sm:$0xff]
      %v967 = vld [vmem:[%s5 + $0x28] sm:$0xff]
      %v968 = vld [vmem:[%s5 + $0x30] sm:$0xff]
      %v969 = vld [vmem:[%s5 + $0x38] sm:$0xff]
      %v970 = vld [vmem:[%s5 + $0x40] sm:$0xff]
      %v971 = vld [vmem:[%s5 + $0x48] sm:$0xff]
      %v972 = vld [vmem:[%s5 + $0x50] sm:$0xff]
      %v973 = vld [vmem:[%s5 + $0x58] sm:$0xff]
      %v974 = vld [vmem:[%s5 + $0x60] sm:$0xff]
      %v975 = vld [vmem:[%s5 + $0x68] sm:$0xff]
      %v976 = vld [vmem:[%s5 + $0x70] sm:$0xff]
      %v977 = vld [vmem:[%s5 + $0x78] sm:$0xff]
      %v978 = vld [vmem:[%s5 + $0x80] sm:$0xff]
      %v979 = vld [vmem:[%s5 + $0x88] sm:$0xff]
      %v980 = vld [vmem:[%s5 + $0x90] sm:$0xff]
      %v981 = vld [vmem:[%s5 + $0x98] sm:$0xff]
      %v982 = vld [vmem:[%s5 + $0xa0] sm:$0xff]
      %v983 = vld [vmem:[%s5 + $0xa8] sm:$0xff]
      %v984 = vld [vmem:[%s5 + $0xb0] sm:$0xff]
      %v985 = vld [vmem:[%s5 + $0xb8] sm:$0xff]
      %vm986 = vcmask 523264
      %v988 = vsel %vm986, %v961, 0
      %990 = vmatprep.subr.mxu0 0.0
      %991 = vmatpush1.msra.mxu0 %v962
      %992 = vmatprep.subr.mxu0 0.0
      %993 = vmatpush1.msra.mxu0 %v963
      %994 = vmatprep.subr.mxu0 0.0
      %995 = vmatpush1.msra.mxu0 %v964
      %996 = vmatprep.subr.mxu0 0.0
      %997 = vmatpush1.msra.mxu0 %v965
      %998 = vmatprep.subr.mxu0 0.0
      %999 = vmatpush1.msra.mxu0 %v966
      %1000 = vmatprep.subr.mxu0 0.0
      %1001 = vmatpush1.msra.mxu0 %v967
      %1002 = vmatprep.subr.mxu0 0.0
      %1003 = vmatpush1.msra.mxu0 %v968
      %1004 = vmatprep.subr.mxu0 0.0
      %1005 = vmatpush1.msra.mxu0 %v969
      %1006 = vmatprep.subr.mxu0 0.0
      %1007 = vmatpush1.msra.mxu0 %v970
      %1008 = vmatprep.subr.mxu0 0.0
      %1009 = vmatpush1.msra.mxu0 %v971
      %1010 = vmatprep.subr.mxu0 0.0
      %1011 = vmatpush1.msra.mxu0 %v972
      %1012 = vmatprep.subr.mxu0 0.0
      %1013 = vmatpush1.msra.mxu0 %v973
      %1014 = vmatprep.subr.mxu0 0.0
      %1015 = vmatpush1.msra.mxu0 %v974
      %1016 = vmatprep.subr.mxu0 0.0
      %1017 = vmatpush1.msra.mxu0 %v975
      %1018 = vmatprep.subr.mxu0 0.0
      %1019 = vmatpush1.msra.mxu0 %v976
      %1020 = vmatprep.subr.mxu0 0.0
      %1021 = vmatpush1.msra.mxu0 %v977
      %1022 = vmatprep.subr.mxu0 0.0
      %1023 = vmatpush1.msra.mxu0 %v978
      %1024 = vmatprep.subr.mxu0 0.0
      %1025 = vmatpush1.msra.mxu0 %v979
      %1026 = vmatprep.subr.mxu0 0.0
      %1027 = vmatpush1.msra.mxu0 %v980
      %1028 = vmatprep.subr.mxu0 0.0
      %1029 = vmatpush1.msra.mxu0 %v981
      %1030 = vmatprep.subr.mxu0 0.0
      %1031 = vmatpush1.msra.mxu0 %v982
      %1032 = vmatprep.subr.mxu0 0.0
      %1033 = vmatpush1.msra.mxu0 %v983
      %1034 = vmatprep.subr.mxu0 0.0
      %1035 = vmatpush1.msra.mxu0 %v984
      %1036 = vmatprep.subr.mxu0 0.0
      %1037 = vmatpush1.msra.mxu0 %v985
      %1038 = vmatprep.subr.mxu0 0.0
      %1039 = vmatpush1.msra.mxu0 0.0
      %1040 = vmatprep.subr.mxu0 0.0
      %1041 = vmatpush1.msra.mxu0 0.0
      %1042 = vmatprep.subr.mxu0 0.0
      %1043 = vmatpush1.msra.mxu0 0.0
      %1044 = vmatprep.subr.mxu0 0.0
      %1045 = vmatpush1.msra.mxu0 0.0
      %1046 = vmatprep.subr.mxu0 0.0
      %1047 = vmatpush1.msra.mxu0 0.0
      %1048 = vmatprep.subr.mxu0 0.0
      %1049 = vmatpush1.msra.mxu0 0.0
      %1050 = vmatprep.subr.mxu0 0.0
      %1051 = vmatpush1.msra.mxu0 0.0
      %1052 = vmatprep.subr.mxu0 0.0
      %1053 = vmatpush1.msra.mxu0 0.0
      %1054 = vmatprep.mubr.f32.mxu0 %v988
      %1055 = vmatmul.mubr.f32.gmra.mrb[0].mxu0 %v960
      %v1056 = vpop.f32.mrb[0].mxu0
      %v1057 = vadd.f32 0.0, %v1056
      %v1058 = vpop.f32.mrb[0].mxu0
      %1059 = vdwg.mxu0
      %1060 = vst [vmem:[%s289] sm:$0xff] %v1057
      %p1061 = scmp.lt.s32.totalorder %s19, 1
      %s1062 = scalar_select %p1061, %s19, 1
      %s1063 = smul.addr %s1062, 2
      %s1064 = smul.addr %s1063, 8
      %s1065 = scalar_lea.vmem %s6, %s1064
      %p1066 = scmp.lt.s32.totalorder %s19, 1
      %s1067 = scalar_select %p1066, %s19, 1
      %s1068 = smul.addr %s1067, 8
      %s1069 = scalar_lea.vmem %s7, %s1068
      // Predicated region
      $region45: #{conv_down_forward.1} parent=43 // pred_check
        %p1070 = pneg %p168
      $region46: #{conv_down_forward.1} parent=43 // pred_check_branch
        %1072 = sbr.rel (%p1070) target = $region48
      $region47: #{conv_down_forward.1} parent=43 // pred_region
        _
      $region48: #{conv_down_forward.1} parent=43 // pred_fallthru
        _
      // Predicated region
      $region49: #{conv_down_forward.1} parent=43 // pred_check
        %p1073 = pneg %p194
      $region50: #{conv_down_forward.1} parent=43 // pred_check_branch
        %1075 = sbr.rel (%p1073) target = $region52
      $region51: #{conv_down_forward.1} parent=43 // pred_region
        _
      $region52: #{conv_down_forward.1} parent=43 // pred_fallthru
        _
    $region44: #{conv_down_forward.1} parent=5 // pred_fallthru
      _
    %p1076 = scmp.le.s32.totalorder 2, %s14
    // Predicated region
    $region53: #{conv_down_forward.1} parent=5 // pred_check
      %p1077 = pneg %p1076
    $region54: #{conv_down_forward.1} parent=5 // pred_check_branch
      %1079 = sbr.rel (%p1077) target = $region56
    $region55: #{conv_down_forward.1} parent=5 // pred_region
      %s1080 = ssub.s32 %s14, 2
      // Predicated region
      $region57: #{conv_down_forward.1} parent=55 // pred_check
        %p1081 = pneg %p174
      $region58: #{conv_down_forward.1} parent=55 // pred_check_branch
        %1083 = sbr.rel (%p1081) target = $region60
      $region59: #{conv_down_forward.1} parent=55 // pred_region
        %p1084 = scmp.lt.s32.totalorder %s20, 1
        %s1085 = scalar_select %p1084, %s20, 1
        %s1086 = smul.addr %s1085, 2
        %s1087 = smul.addr %s1086, 8
        %s1088 = scalar_lea.vmem %s6, %s1087
      $region60: #{conv_down_forward.1} parent=55 // pred_fallthru
        _
      // Predicated region
      $region61: #{conv_down_forward.1} parent=55 // pred_check
        %p1089 = pneg %p200
      $region62: #{conv_down_forward.1} parent=55 // pred_check_branch
        %1091 = sbr.rel (%p1089) target = $region64
      $region63: #{conv_down_forward.1} parent=55 // pred_region
        %p1092 = scmp.lt.s32.totalorder %s20, 1
        %s1093 = scalar_select %p1092, %s20, 1
        %s1094 = smul.addr %s1093, 8
        %s1095 = scalar_lea.vmem %s7, %s1094
      $region64: #{conv_down_forward.1} parent=55 // pred_fallthru
        _
    $region56: #{conv_down_forward.1} parent=5 // pred_fallthru
      _
  $region6: #{conv_down_forward.1} parent=0 // loop_footer
    %s18 = sadd.s32 1, %s14
  $region7: #{conv_down_forward.1} parent=0 // loop_footer_branch
    %13 = sbr.rel target = $region3
  $region8: #{conv_down_forward.1} parent=0 // loop_exit
    _

</llo_original>
